<compile_context>
chip_gen: v6e
topology: v6e:2x2x1
jax: 0.10.0
libtpu: 0.0.40
codegen_flags: <defaults>
</compile_context>

<pallas_src>
import math

import jax
import jax.numpy as jnp
from jax import lax
from jax.experimental import pallas as pl
from jax.experimental.pallas import tpu as pltpu


def _nl_attn_kernel(q_ref, k_ref, vg_ref, vres_ref, m_ref, gwT_ref, owT_ref,
                    o_ref, acc_ref):
    kb = pl.program_id(1)
    nkb = pl.num_programs(1)

    @pl.when(kb == 0)
    def _():
        acc_ref[...] = jnp.zeros_like(acc_ref)

    q_cn = q_ref[0]            # [C, N]   bf16, resident across key blocks
    k_cn = k_ref[0]            # [C, Tk]  bf16, current key block
    vg_cn = vg_ref[0]          # [C, Tk]  bf16

    # Folded theta/phi projection + 1/sqrt(d) scale:  mk = M @ k_blk.
    mk = jnp.dot(m_ref[...], k_cn,
                 preferred_element_type=jnp.float32).astype(jnp.bfloat16)   # [C, Tk]

    # S^T block: st[j, i] = q_i^T M k_j.  Transposed-LHS dot_general, so the
    # MXU consumes mk directly (no XLU vxpose, no materialized copy).
    st = lax.dot_general(mk, q_cn, (((0,), (0,)), ((), ())),
                         preferred_element_type=jnp.float32)                # [Tk, N]

    # Softmax over the QUERY axis (torch softmax dim=1) == lane axis of st.
    # Self-contained per key block because the full query dim is resident.
    # Stats in f32; elementwise exp in bf16 (bf16 EUP path on v6e/v7x).
    mx = jnp.max(st, axis=1, keepdims=True)                                 # f32 [Tk,1]
    e = jnp.exp((st - mx).astype(jnp.bfloat16))                             # bf16 [Tk,N]
    l = jnp.sum(e, axis=1, keepdims=True, dtype=jnp.float32)                # f32 [Tk,1]
    p = e * pl.reciprocal(l, approx=True).astype(jnp.bfloat16)              # bf16 [Tk,N]

    # g-projection of this key block, then accumulate O^T += Vp_blk @ P_blk.
    vpT = jnp.dot(gwT_ref[...], vg_cn,
                  preferred_element_type=jnp.float32).astype(jnp.bfloat16)  # [d, Tk]
    acc_ref[...] += jnp.dot(vpT, p, preferred_element_type=jnp.float32)     # [d, N]

    # Final key block: output projection (conv_out) + f32 residual, lane-dense store.
    @pl.when(kb == nkb - 1)
    def _():
        out = vres_ref[0] + jnp.dot(owT_ref[...],
                                    acc_ref[...].astype(jnp.bfloat16),
                                    preferred_element_type=jnp.float32)     # [C, N]
        o_ref[0] = out.astype(o_ref.dtype)


def _pick_tk(N):
    """Key-block size (multiple of 128, capped at 256) and padded key length."""
    for cand in (256, 128):
        if N % cand == 0:
            return cand, N
    tk = 128 if N < 4096 else 256
    return tk, pl.cdiv(N, tk) * tk


def _vmem_limit_bytes(C, N, tk, d):
    """Size the scoped-VMEM request from real buffer sizes (generation-aware cap)."""
    bf16, f32 = 2, 4
    pipelined = (C * N * bf16              # q (resident, bf16)
                 + 2 * C * tk * bf16       # k / v_g key blocks (bf16)
                 + C * N * f32             # residual (resident, f32)
                 + C * N * f32             # output (f32)
                 + (C * C + 2 * d * C) * bf16)
    scratch = d * N * f32                                  # O^T accumulator
    live = tk * N * (f32 + bf16 + bf16 + f32)              # st, e, p + slack
    est = 2 * pipelined + scratch + live                   # x2 for double buffering
    try:
        cap = int(getattr(pltpu.get_tpu_info(), "vmem_capacity_bytes",
                          64 * 1024 * 1024))
    except Exception:
        cap = 64 * 1024 * 1024                             # v7x per-TC lower bound
    return int(min(max(2 * est, 32 * 1024 * 1024), int(cap * 0.9)))


def nl_attention(q, k, v, theta_w, phi_w, g_w, out_w, *, tk=None):
    """q, k, v: [B, C, H, W] float32 (NCHW, like PyTorch).
    theta_w/phi_w/g_w: [C, d]; out_w: [d, C].  Returns [B, C, H, W] float32."""
    B, C, H, W = q.shape
    N = H * W
    d = theta_w.shape[1]

    # NCHW -> [B, C, N] is a pure reshape (H/W already trailing -> no transpose).
    qf = q.reshape(B, C, N).astype(jnp.bfloat16)
    kf = k.reshape(B, C, N).astype(jnp.bfloat16)
    vg = v.reshape(B, C, N).astype(jnp.bfloat16)
    vres = v.reshape(B, C, N)                              # f32 residual path

    # Fold theta & phi (and the 1/sqrt(d) score scale) into one [C, C] matrix;
    # pre-transpose the remaining tiny weights so in-kernel matmuls are plain A@B.
    m_w = (jnp.dot(theta_w, phi_w.T) * (1.0 / math.sqrt(d))).astype(jnp.bfloat16)
    gwT = jnp.transpose(g_w).astype(jnp.bfloat16)          # [d, C]
    owT = jnp.transpose(out_w).astype(jnp.bfloat16)        # [C, d]

    if tk is None:
        tk, n_pad = _pick_tk(N)
    else:
        assert tk % 128 == 0 or tk == N, "tk must be a multiple of 128 (or == N)"
        n_pad = pl.cdiv(N, tk) * tk
    if n_pad != N:
        # Zero-padded keys contribute exactly zero (g of zero is zero), so only
        # the key-axis operands are padded; q / residual / output keep length N.
        pad = ((0, 0), (0, 0), (0, n_pad - N))
        kf = jnp.pad(kf, pad)
        vg = jnp.pad(vg, pad)
    nkb = n_pad // tk

    full_q = pl.BlockSpec((1, C, N), lambda b, j: (b, 0, 0))
    full_res = pl.BlockSpec((1, C, N), lambda b, j: (b, 0, 0))
    key_tok = pl.BlockSpec((1, C, tk), lambda b, j: (b, 0, j))
    w_cc = pl.BlockSpec((C, C), lambda b, j: (0, 0))
    w_dc = pl.BlockSpec((d, C), lambda b, j: (0, 0))
    w_cd = pl.BlockSpec((C, d), lambda b, j: (0, 0))

    out_cn = pl.pallas_call(
        _nl_attn_kernel,
        out_shape=jax.ShapeDtypeStruct((B, C, N), jnp.float32),
        grid=(B, nkb),
        in_specs=[full_q, key_tok, key_tok, full_res, w_cc, w_dc, w_cd],
        out_specs=pl.BlockSpec((1, C, N), lambda b, j: (b, 0, 0)),
        scratch_shapes=[pltpu.VMEM((d, N), jnp.float32)],
        compiler_params=pltpu.CompilerParams(
            dimension_semantics=("parallel", "arbitrary"),
            vmem_limit_bytes=_vmem_limit_bytes(C, N, tk, d),
        ),
    )(qf, kf, vg, vres, m_w, gwT, owT)

    # [B, C, N] -> NCHW is again a pure reshape.
    return out_cn.reshape(B, C, H, W)


def _reference(q, k, v, theta_w, phi_w, g_w, out_w):
    """Pure-JAX reference mirroring the PyTorch forward (embedded_gaussian)."""
    B, C, H, W = q.shape
    N = H * W
    d = theta_w.shape[1]
    tok = lambda x: jnp.transpose(x, (0, 2, 3, 1)).reshape(B, N, C)
    qf, kf, vf = tok(q), tok(k), tok(v)
    qp = jnp.einsum("bnc,cd->bnd", qf, theta_w)
    kp = jnp.einsum("bnc,cd->bnd", kf, phi_w)
    vp = jnp.einsum("bnc,cd->bnd", vf, g_w)
    s = jnp.einsum("bid,bjd->bij", qp, kp) / math.sqrt(d)
    p = jax.nn.softmax(s, axis=1)  # softmax over the query axis (torch dim=1)
    o = jnp.einsum("bij,bjd->bid", p, vp)
    out = vf + jnp.einsum("bnd,dc->bnc", o, out_w)
    return jnp.transpose(out.reshape(B, H, W, C), (0, 3, 1, 2))


if __name__ == "__main__":
    key = jax.random.PRNGKey(0)
    kq, kk, kv, k1, k2, k3, k4 = jax.random.split(key, 7)

    B, C, d = 2, 4, 32          # in_channel = 4, hidden_channel = 32
    scale = 0.1
    theta_w = scale * jax.random.normal(k1, (C, d), dtype=jnp.float32)
    phi_w = scale * jax.random.normal(k2, (C, d), dtype=jnp.float32)
    g_w = scale * jax.random.normal(k3, (C, d), dtype=jnp.float32)
    out_w = scale * jax.random.normal(k4, (d, C), dtype=jnp.float32)

    # Case 1: H=W=16 (N=256), tk=128 -> two key blocks (accumulator revisit path).
    H = W = 16
    q = jax.random.normal(kq, (B, C, H, W), dtype=jnp.float32)
    k = jax.random.normal(kk, (B, C, H, W), dtype=jnp.float32)
    v = jax.random.normal(kv, (B, C, H, W), dtype=jnp.float32)
    out = jax.block_until_ready(
        nl_attention(q, k, v, theta_w, phi_w, g_w, out_w, tk=128))
    ref = _reference(q, k, v, theta_w, phi_w, g_w, out_w)
    assert out.shape == (B, C, H, W)
    assert jnp.allclose(out, ref, atol=1e-2, rtol=1e-2), "mismatch (N=256)"

    # Case 2: H=W=12 (N=144, no multiple-of-128 divisor) -> padded-key fallback.
    H2 = W2 = 12
    q2 = jax.random.normal(kq, (B, C, H2, W2), dtype=jnp.float32)
    k2t = jax.random.normal(kk, (B, C, H2, W2), dtype=jnp.float32)
    v2 = jax.random.normal(kv, (B, C, H2, W2), dtype=jnp.float32)
    out2 = jax.block_until_ready(
        nl_attention(q2, k2t, v2, theta_w, phi_w, g_w, out_w))
    ref2 = _reference(q2, k2t, v2, theta_w, phi_w, g_w, out_w)
    assert out2.shape == (B, C, H2, W2)
    assert jnp.allclose(out2, ref2, atol=1e-2, rtol=1e-2), "mismatch (N=144)"

    print("KERNEL_OK")
</pallas_src>

<mosaic_0001>
module attributes {stable_mosaic.version = 11 : i64} {
  func.func @_nl_attn_kernel(%arg0: i32, %arg1: i32, %arg2: memref<1x4x256xbf16, #tpu.memory_space<vmem>>, %arg3: memref<1x4x128xbf16, #tpu.memory_space<vmem>>, %arg4: memref<1x4x128xbf16, #tpu.memory_space<vmem>>, %arg5: memref<1x4x256xf32, #tpu.memory_space<vmem>>, %arg6: memref<4x4xbf16, #tpu.memory_space<vmem>>, %arg7: memref<32x4xbf16, #tpu.memory_space<vmem>>, %arg8: memref<4x32xbf16, #tpu.memory_space<vmem>>, %arg9: memref<1x4x256xf32, #tpu.memory_space<vmem>>, %arg10: memref<32x256xf32, #tpu.memory_space<vmem>>) attributes {dimension_semantics = [#tpu.dimension_semantics<parallel>, #tpu.dimension_semantics<arbitrary>], iteration_bounds = array<i64: 2, 2>, scalar_prefetch = 0 : i64, scratch_operands = 1 : i64, tpu.core_type = #tpu.core_type<tc>, window_params = [{transform_indices = @transform_0, window_bounds = array<i64: 1, 4, 256>}, {transform_indices = @transform_1, window_bounds = array<i64: 1, 4, 128>}, {transform_indices = @transform_2, window_bounds = array<i64: 1, 4, 128>}, {transform_indices = @transform_3, window_bounds = array<i64: 1, 4, 256>}, {pipeline_mode = #tpu.pipeline_mode<synchronous>, transform_indices = @transform_4, window_bounds = array<i64: 4, 4>}, {pipeline_mode = #tpu.pipeline_mode<synchronous>, transform_indices = @transform_5, window_bounds = array<i64: 32, 4>}, {pipeline_mode = #tpu.pipeline_mode<synchronous>, transform_indices = @transform_6, window_bounds = array<i64: 4, 32>}, {transform_indices = @transform_7, window_bounds = array<i64: 1, 4, 256>}]} {
    %c0_i32 = arith.constant 0 : i32
    %0 = arith.cmpi eq, %arg1, %c0_i32 : i32
    %1 = arith.extui %0 : i1 to i32
    %c0_i32_0 = arith.constant 0 : i32
    %2 = arith.cmpi ne, %1, %c0_i32_0 : i32
    scf.if %2 {
      %cst_23 = arith.constant 0.000000e+00 : f32
      %36 = vector.broadcast %cst_23 : f32 to vector<32x256xf32>
      %c0_24 = arith.constant 0 : index
      %c0_25 = arith.constant 0 : index
      %37 = vector.load %arg10[%c0_24, %c0_25] : memref<32x256xf32, #tpu.memory_space<vmem>>, vector<32x256xf32>
      tpu.vector_store %arg10[%c0_24, %c0_25], %36 {strides = array<i32>} : memref<32x256xf32, #tpu.memory_space<vmem>>, vector<32x256xf32>,
    } else {
    }
    %c0 = arith.constant 0 : index
    %c0_1 = arith.constant 0 : index
    %c0_2 = arith.constant 0 : index
    %3 = vector.load %arg2[%c0, %c0_1, %c0_2] : memref<1x4x256xbf16, #tpu.memory_space<vmem>>, vector<1x4x256xbf16>
    %4 = vector.shape_cast %3 : vector<1x4x256xbf16> to vector<4x256xbf16>
    %c0_3 = arith.constant 0 : index
    %c0_4 = arith.constant 0 : index
    %c0_5 = arith.constant 0 : index
    %5 = vector.load %arg3[%c0_3, %c0_4, %c0_5] : memref<1x4x128xbf16, #tpu.memory_space<vmem>>, vector<1x4x128xbf16>
    %6 = vector.shape_cast %5 : vector<1x4x128xbf16> to vector<4x128xbf16>
    %c0_6 = arith.constant 0 : index
    %c0_7 = arith.constant 0 : index
    %c0_8 = arith.constant 0 : index
    %7 = vector.load %arg4[%c0_6, %c0_7, %c0_8] : memref<1x4x128xbf16, #tpu.memory_space<vmem>>, vector<1x4x128xbf16>
    %8 = vector.shape_cast %7 : vector<1x4x128xbf16> to vector<4x128xbf16>
    %c0_9 = arith.constant 0 : index
    %c0_10 = arith.constant 0 : index
    %9 = vector.load %arg6[%c0_9, %c0_10] : memref<4x4xbf16, #tpu.memory_space<vmem>>, vector<4x4xbf16>
    %cst = arith.constant dense<0.000000e+00> : vector<4x128xf32>
    %10 = tpu.matmul %9, %6, %cst {dimension_numbers = #tpu.dot_dimension_numbers<[1], [0], [0], [1], [0, 0, 1, 1], [], []>} : vector<4x4xbf16>, vector<4x128xbf16>, vector<4x128xf32> -> vector<4x128xf32>
    %11 = arith.truncf %10 : vector<4x128xf32> to vector<4x128xbf16>
    %cst_11 = arith.constant dense<0.000000e+00> : vector<128x256xf32>
    %12 = tpu.matmul %11, %4, %cst_11 {dimension_numbers = #tpu.dot_dimension_numbers<[0], [0], [1], [1], [0, 1, 1, 1], [], []>} : vector<4x128xbf16>, vector<4x256xbf16>, vector<128x256xf32> -> vector<128x256xf32>
    %cst_12 = arith.constant dense<0xFF800000> : vector<128xf32>
    %13 = vector.multi_reduction <maximumf>, %12, %cst_12 [1] : vector<128x256xf32> to vector<128xf32>
    %14 = vector.shape_cast %13 : vector<128xf32> to vector<128x1xf32>
    %15 = vector.broadcast %14 : vector<128x1xf32> to vector<128x256xf32>
    %16 = arith.subf %12, %15 : vector<128x256xf32>
    %17 = arith.truncf %16 : vector<128x256xf32> to vector<128x256xbf16>
    %18 = math.exp %17 : vector<128x256xbf16>
    %19 = arith.extf %18 : vector<128x256xbf16> to vector<128x256xf32>
    %cst_13 = arith.constant dense<0.000000e+00> : vector<128xf32>
    %20 = vector.multi_reduction <add>, %19, %cst_13 [1] : vector<128x256xf32> to vector<128xf32>
    %21 = vector.shape_cast %20 : vector<128xf32> to vector<128x1xf32>
    %22 = tpu.reciprocal %21 {approx = true} : vector<128x1xf32> -> vector<128x1xf32>
    %23 = arith.truncf %22 : vector<128x1xf32> to vector<128x1xbf16>
    %24 = vector.broadcast %23 : vector<128x1xbf16> to vector<128x256xbf16>
    %25 = arith.mulf %18, %24 : vector<128x256xbf16>
    %c0_14 = arith.constant 0 : index
    %c0_15 = arith.constant 0 : index
    %26 = vector.load %arg7[%c0_14, %c0_15] : memref<32x4xbf16, #tpu.memory_space<vmem>>, vector<32x4xbf16>
    %cst_16 = arith.constant dense<0.000000e+00> : vector<32x128xf32>
    %27 = tpu.matmul %26, %8, %cst_16 {dimension_numbers = #tpu.dot_dimension_numbers<[1], [0], [0], [1], [0, 0, 1, 1], [], []>} : vector<32x4xbf16>, vector<4x128xbf16>, vector<32x128xf32> -> vector<32x128xf32>
    %28 = arith.truncf %27 : vector<32x128xf32> to vector<32x128xbf16>
    %c0_17 = arith.constant 0 : index
    %c0_18 = arith.constant 0 : index
    %29 = vector.load %arg10[%c0_17, %c0_18] : memref<32x256xf32, #tpu.memory_space<vmem>>, vector<32x256xf32>
    %cst_19 = arith.constant dense<0.000000e+00> : vector<32x256xf32>
    %30 = tpu.matmul %28, %25, %cst_19 {dimension_numbers = #tpu.dot_dimension_numbers<[1], [0], [0], [1], [0, 0, 1, 1], [], []>} : vector<32x128xbf16>, vector<128x256xbf16>, vector<32x256xf32> -> vector<32x256xf32>
    %31 = arith.addf %29, %30 : vector<32x256xf32>
    %c0_20 = arith.constant 0 : index
    %c0_21 = arith.constant 0 : index
    %32 = vector.load %arg10[%c0_20, %c0_21] : memref<32x256xf32, #tpu.memory_space<vmem>>, vector<32x256xf32>
    tpu.vector_store %arg10[%c0_20, %c0_21], %31 {strides = array<i32>} : memref<32x256xf32, #tpu.memory_space<vmem>>, vector<32x256xf32>,
    %c1_i32 = arith.constant 1 : i32
    %33 = arith.cmpi eq, %arg1, %c1_i32 : i32
    %34 = arith.extui %33 : i1 to i32
    %c0_i32_22 = arith.constant 0 : i32
    %35 = arith.cmpi ne, %34, %c0_i32_22 : i32
    scf.if %35 {
      %c0_23 = arith.constant 0 : index
      %c0_24 = arith.constant 0 : index
      %c0_25 = arith.constant 0 : index
      %36 = vector.load %arg5[%c0_23, %c0_24, %c0_25] : memref<1x4x256xf32, #tpu.memory_space<vmem>>, vector<1x4x256xf32>
      %37 = vector.shape_cast %36 : vector<1x4x256xf32> to vector<4x256xf32>
      %c0_26 = arith.constant 0 : index
      %c0_27 = arith.constant 0 : index
      %38 = vector.load %arg8[%c0_26, %c0_27] : memref<4x32xbf16, #tpu.memory_space<vmem>>, vector<4x32xbf16>
      %c0_28 = arith.constant 0 : index
      %c0_29 = arith.constant 0 : index
      %39 = vector.load %arg10[%c0_28, %c0_29] : memref<32x256xf32, #tpu.memory_space<vmem>>, vector<32x256xf32>
      %40 = arith.truncf %39 : vector<32x256xf32> to vector<32x256xbf16>
      %cst_30 = arith.constant dense<0.000000e+00> : vector<4x256xf32>
      %41 = tpu.matmul %38, %40, %cst_30 {dimension_numbers = #tpu.dot_dimension_numbers<[1], [0], [0], [1], [0, 0, 1, 1], [], []>} : vector<4x32xbf16>, vector<32x256xbf16>, vector<4x256xf32> -> vector<4x256xf32>
      %42 = arith.addf %37, %41 : vector<4x256xf32>
      %c0_31 = arith.constant 0 : index
      %c0_32 = arith.constant 0 : index
      %c0_33 = arith.constant 0 : index
      %43 = vector.load %arg9[%c0_31, %c0_32, %c0_33] : memref<1x4x256xf32, #tpu.memory_space<vmem>>, vector<1x4x256xf32>
      %44 = vector.shape_cast %43 : vector<1x4x256xf32> to vector<4x256xf32>
      %45 = vector.shape_cast %42 : vector<4x256xf32> to vector<1x4x256xf32>
      tpu.vector_store %arg9[%c0_31, %c0_32, %c0_33], %45 {strides = array<i32>} : memref<1x4x256xf32, #tpu.memory_space<vmem>>, vector<1x4x256xf32>,
    } else {
    }
    return
  }
  func.func @transform_0(%arg0: i32, %arg1: i32) -> (i32, i32, i32) {
    %c0_i32 = arith.constant 0 : i32
    %c0_i32_0 = arith.constant 0 : i32
    %c0_i32_1 = arith.constant 0 : i32
    return %arg0, %c0_i32, %c0_i32_0 : i32, i32, i32
  }
  func.func @transform_1(%arg0: i32, %arg1: i32) -> (i32, i32, i32) {
    %c0_i32 = arith.constant 0 : i32
    %c0_i32_0 = arith.constant 0 : i32
    return %arg0, %c0_i32, %arg1 : i32, i32, i32
  }
  func.func @transform_2(%arg0: i32, %arg1: i32) -> (i32, i32, i32) {
    %c0_i32 = arith.constant 0 : i32
    %c0_i32_0 = arith.constant 0 : i32
    return %arg0, %c0_i32, %arg1 : i32, i32, i32
  }
  func.func @transform_3(%arg0: i32, %arg1: i32) -> (i32, i32, i32) {
    %c0_i32 = arith.constant 0 : i32
    %c0_i32_0 = arith.constant 0 : i32
    %c0_i32_1 = arith.constant 0 : i32
    return %arg0, %c0_i32, %c0_i32_0 : i32, i32, i32
  }
  func.func @transform_4(%arg0: i32, %arg1: i32) -> (i32, i32) {
    %c0_i32 = arith.constant 0 : i32
    %c0_i32_0 = arith.constant 0 : i32
    %c0_i32_1 = arith.constant 0 : i32
    return %c0_i32, %c0_i32_0 : i32, i32
  }
  func.func @transform_5(%arg0: i32, %arg1: i32) -> (i32, i32) {
    %c0_i32 = arith.constant 0 : i32
    %c0_i32_0 = arith.constant 0 : i32
    %c0_i32_1 = arith.constant 0 : i32
    return %c0_i32, %c0_i32_0 : i32, i32
  }
  func.func @transform_6(%arg0: i32, %arg1: i32) -> (i32, i32) {
    %c0_i32 = arith.constant 0 : i32
    %c0_i32_0 = arith.constant 0 : i32
    %c0_i32_1 = arith.constant 0 : i32
    return %c0_i32, %c0_i32_0 : i32, i32
  }
  func.func @transform_7(%arg0: i32, %arg1: i32) -> (i32, i32, i32) {
    %c0_i32 = arith.constant 0 : i32
    %c0_i32_0 = arith.constant 0 : i32
    %c0_i32_1 = arith.constant 0 : i32
    return %arg0, %c0_i32, %c0_i32_0 : i32, i32, i32
  }
}

</mosaic_0001>

<llo_original>
// kernel: tpu_custom_call.1
$region0: #{tpu_custom_call.1}
  #allocation0 [shape = 'u32[]', space=smem, size = 0x4, offset = 0x4, fixed_abs, tag = 'smem constant byte address 0x4 - core index']
  #allocation1 [shape = 'u32[144,128]{1,0:T(1,128)}', space=vmem, size = 0x12000, scoped, tag = 'internal scratch']
  #allocation2 [shape = 'f32[32,256]{1,0:T(8,128)}', space=vmem, size = 0x8000, scoped, tag = 'scratch operand']
  %s0 = inlined_call_operand.hbm [shape: bf16[2,4,256], index: 0, kind: input, shape index: {}]
  %s1 = inlined_call_operand.hbm [shape: bf16[2,4,256], index: 1, kind: input, shape index: {}]
  %s2 = inlined_call_operand.hbm [shape: bf16[2,4,256], index: 2, kind: input, shape index: {}]
  %s3 = inlined_call_operand.vmem [shape: f32[2,4,256], index: 3, kind: input, shape index: {}]
  %s4 = inlined_call_operand.vmem [shape: bf16[4,4], index: 4, kind: input, shape index: {}]
  %s5 = inlined_call_operand.vmem [shape: bf16[32,4], index: 5, kind: input, shape index: {}]
  %s6 = inlined_call_operand.vmem [shape: bf16[4,32], index: 6, kind: input, shape index: {}]
  %s7 = inlined_call_operand.hbm [shape: f32[2,4,256], index: 7, kind: output, shape index: {}]
  %s8 = sld [smem:[#allocation0]]
  $region81: #{tpu_custom_call.1} parent=0
    _
  %s10 = ssub.s32 1, %s8
  %s11 = scalar_select 0, %s10, %s8
  $region1: #{tpu_custom_call.1} parent=0
    #allocation3 [shape = 'u8[4096]{0}', space=vmem, size = 0x1000, scoped, tag = 'input window, operand 0']
    #allocation4 [shape = 's32[2]{0}', space=sflag, size = 0x8, scoped, tag = 'scoped memory for tpu_custom_call.1']
    #allocation5 [shape = 's32[2]{0}', space=sflag, size = 0x8, scoped, tag = 'scoped memory for tpu_custom_call.1']
    #allocation6 [shape = 'u8[2048]{0}', space=vmem, size = 0x800, scoped, tag = 'input window, operand 1']
    #allocation7 [shape = 's32[2]{0}', space=sflag, size = 0x8, scoped, tag = 'scoped memory for tpu_custom_call.1']
    #allocation8 [shape = 'u8[2048]{0}', space=vmem, size = 0x800, scoped, tag = 'input window, operand 2']
    #allocation9 [shape = 'u8[8192]{0}', space=vmem, size = 0x2000, scoped, tag = 'output window, operand 0']
    %12 = vsyncpa [#allocation4], 0
    %s13 = scalar_lea.sflag [#allocation4], 1
    %14 = vsyncpa %s13, 0
    %15 = vsyncpa [#allocation7], 0
    %s16 = scalar_lea.sflag [#allocation7], 1
    %17 = vsyncpa %s16, 0
    %18 = vsyncpa [#allocation5], 0
    %s19 = scalar_lea.sflag [#allocation5], 1
    %20 = vsyncpa %s19, 0
    loop: start=0, step=1, limit=6
    $region2: #{tpu_custom_call.1} parent=1 // loop_pre_header
      _
    $region3: #{tpu_custom_call.1} parent=1 // loop_header
      %s22 = sphi 0, %s26
      %p23 = scmp.ge.s32.totalorder %s22, 6
      %s29 = sphi 0, %s41
      %s30 = sphi 0, %s37
      %s31 = sphi 0, %s29
      %s32 = sphi 0, %s30
      %s33 = sphi 0, %s31
      %s34 = sphi 0, %s32
      %s44 = sphi 0, %s46
      %s47 = sphi 0, %s44
      %s48 = sphi 0, %s47
      %s64 = sphi 0, %s48
      %s72 = sphi 0, %s74
      %s75 = sphi 0, %s72
      %s76 = sphi 0, %s75
      %s92 = sphi 0, %s76
      %s100 = sphi 0, %s102
      %s103 = sphi 0, %s100
      %s104 = sphi 0, %s103
      %s120 = sphi 0, %s104
      %s126 = sphi 0, %s128
      %s129 = sphi 0, %s126
      %s130 = sphi 0, %s129
      %s146 = sphi 0, %s130
      %s150 = sphi 0, %s150
      %s152 = sphi 0, %s150
      %s153 = sphi 0, %s152
      %s167 = sphi 0, %s153
      %s171 = sphi 0, %s171
      %s173 = sphi 0, %s171
      %s174 = sphi 0, %s173
      %s188 = sphi 0, %s174
      %s192 = sphi 0, %s192
      %s194 = sphi 0, %s192
      %s195 = sphi 0, %s194
      %s209 = sphi 0, %s195
      %s215 = sphi 0, %s217
      %s218 = sphi 0, %s215
      %s219 = sphi 0, %s218
      %s235 = sphi 0, %s219
    $region4: #{tpu_custom_call.1} parent=1 // loop_header_branch
      %25 = sbr.rel (%p23) target = $region8
    $region5: #{tpu_custom_call.1} parent=1 // loop_body
      %s27 = ssub.s32 %s22, 1
      %s28 = ssub.s32 %s22, 2
      %s35 = sadd.s32 1, %s30
      %p36 = scmp.ge.s32.totalorder %s35, 2
      %s37 = scalar_select %p36, 0, %s35
      %s38 = sadd.s32 1, %s29
      %s39 = scalar_select %p36, %s38, %s29
      %p40 = scmp.ge.s32.totalorder %s39, 2
      %s41 = scalar_select %p40, 0, %s39
      %s42 = ssub.s32 %s29, %s41
      %p43 = scmp.eq.s32.totalorder %s42, 0
      %s45 = sadd.s32 %s44, 1
      %s46 = scalar_select %p43, %s44, %s45
      %p49 = pneg %p43
      %p50 = scmp.eq.s32.totalorder %s22, 3
      %p51 = por %p49, %p50
      %p52 = scmp.ne.s32.totalorder %s44, %s47
      %p53 = scmp.eq.s32.totalorder %s22, 0
      %p54 = por %p52, %p53
      %p55 = scmp.ne.s32.totalorder %s44, %s47
      %p56 = scmp.eq.s32.totalorder %s27, 3
      %p57 = por %p55, %p56
      %p58 = scmp.ne.s32.totalorder %s47, %s48
      %p59 = scmp.eq.s32.totalorder %s27, 0
      %p60 = por %p58, %p59
      %p61 = scmp.ne.s32.totalorder %s47, %s48
      %p62 = scmp.eq.s32.totalorder %s28, 3
      %p63 = por %p61, %p62
      %p65 = scmp.ne.s32.totalorder %s48, %s64
      %p66 = scmp.eq.s32.totalorder %s28, 0
      %p67 = por %p65, %p66
      %s68 = ssub.s32 %s29, %s41
      %s69 = ssub.s32 %s30, %s37
      %s70 = sor.u32 %s68, %s69
      %p71 = scmp.eq.s32.totalorder %s70, 0
      %s73 = sadd.s32 %s72, 1
      %s74 = scalar_select %p71, %s72, %s73
      %p77 = pneg %p71
      %p78 = scmp.eq.s32.totalorder %s22, 3
      %p79 = por %p77, %p78
      %p80 = scmp.ne.s32.totalorder %s72, %s75
      %p81 = scmp.eq.s32.totalorder %s22, 0
      %p82 = por %p80, %p81
      %p83 = scmp.ne.s32.totalorder %s72, %s75
      %p84 = scmp.eq.s32.totalorder %s27, 3
      %p85 = por %p83, %p84
      %p86 = scmp.ne.s32.totalorder %s75, %s76
      %p87 = scmp.eq.s32.totalorder %s27, 0
      %p88 = por %p86, %p87
      %p89 = scmp.ne.s32.totalorder %s75, %s76
      %p90 = scmp.eq.s32.totalorder %s28, 3
      %p91 = por %p89, %p90
      %p93 = scmp.ne.s32.totalorder %s76, %s92
      %p94 = scmp.eq.s32.totalorder %s28, 0
      %p95 = por %p93, %p94
      %s96 = ssub.s32 %s29, %s41
      %s97 = ssub.s32 %s30, %s37
      %s98 = sor.u32 %s96, %s97
      %p99 = scmp.eq.s32.totalorder %s98, 0
      %s101 = sadd.s32 %s100, 1
      %s102 = scalar_select %p99, %s100, %s101
      %p105 = pneg %p99
      %p106 = scmp.eq.s32.totalorder %s22, 3
      %p107 = por %p105, %p106
      %p108 = scmp.ne.s32.totalorder %s100, %s103
      %p109 = scmp.eq.s32.totalorder %s22, 0
      %p110 = por %p108, %p109
      %p111 = scmp.ne.s32.totalorder %s100, %s103
      %p112 = scmp.eq.s32.totalorder %s27, 3
      %p113 = por %p111, %p112
      %p114 = scmp.ne.s32.totalorder %s103, %s104
      %p115 = scmp.eq.s32.totalorder %s27, 0
      %p116 = por %p114, %p115
      %p117 = scmp.ne.s32.totalorder %s103, %s104
      %p118 = scmp.eq.s32.totalorder %s28, 3
      %p119 = por %p117, %p118
      %p121 = scmp.ne.s32.totalorder %s104, %s120
      %p122 = scmp.eq.s32.totalorder %s28, 0
      %p123 = por %p121, %p122
      %s124 = ssub.s32 %s29, %s41
      %p125 = scmp.eq.s32.totalorder %s124, 0
      %s127 = sadd.s32 %s126, 1
      %s128 = scalar_select %p125, %s126, %s127
      %p131 = pneg %p125
      %p132 = scmp.eq.s32.totalorder %s22, 3
      %p133 = por %p131, %p132
      %p134 = scmp.ne.s32.totalorder %s126, %s129
      %p135 = scmp.eq.s32.totalorder %s22, 0
      %p136 = por %p134, %p135
      %p137 = scmp.ne.s32.totalorder %s126, %s129
      %p138 = scmp.eq.s32.totalorder %s27, 3
      %p139 = por %p137, %p138
      %p140 = scmp.ne.s32.totalorder %s129, %s130
      %p141 = scmp.eq.s32.totalorder %s27, 0
      %p142 = por %p140, %p141
      %p143 = scmp.ne.s32.totalorder %s129, %s130
      %p144 = scmp.eq.s32.totalorder %s28, 3
      %p145 = por %p143, %p144
      %p147 = scmp.ne.s32.totalorder %s130, %s146
      %p148 = scmp.eq.s32.totalorder %s28, 0
      %p149 = por %p147, %p148
      %s151 = sadd.s32 %s150, 1
      %p154 = scmp.eq.s32.totalorder %s22, 3
      %p155 = scmp.ne.s32.totalorder %s150, %s152
      %p156 = scmp.eq.s32.totalorder %s22, 0
      %p157 = por %p155, %p156
      %p158 = scmp.ne.s32.totalorder %s150, %s152
      %p159 = scmp.eq.s32.totalorder %s27, 3
      %p160 = por %p158, %p159
      %p161 = scmp.ne.s32.totalorder %s152, %s153
      %p162 = scmp.eq.s32.totalorder %s27, 0
      %p163 = por %p161, %p162
      %p164 = scmp.ne.s32.totalorder %s152, %s153
      %p165 = scmp.eq.s32.totalorder %s28, 3
      %p166 = por %p164, %p165
      %p168 = scmp.ne.s32.totalorder %s153, %s167
      %p169 = scmp.eq.s32.totalorder %s28, 0
      %p170 = por %p168, %p169
      %s172 = sadd.s32 %s171, 1
      %p175 = scmp.eq.s32.totalorder %s22, 3
      %p176 = scmp.ne.s32.totalorder %s171, %s173
      %p177 = scmp.eq.s32.totalorder %s22, 0
      %p178 = por %p176, %p177
      %p179 = scmp.ne.s32.totalorder %s171, %s173
      %p180 = scmp.eq.s32.totalorder %s27, 3
      %p181 = por %p179, %p180
      %p182 = scmp.ne.s32.totalorder %s173, %s174
      %p183 = scmp.eq.s32.totalorder %s27, 0
      %p184 = por %p182, %p183
      %p185 = scmp.ne.s32.totalorder %s173, %s174
      %p186 = scmp.eq.s32.totalorder %s28, 3
      %p187 = por %p185, %p186
      %p189 = scmp.ne.s32.totalorder %s174, %s188
      %p190 = scmp.eq.s32.totalorder %s28, 0
      %p191 = por %p189, %p190
      %s193 = sadd.s32 %s192, 1
      %p196 = scmp.eq.s32.totalorder %s22, 3
      %p197 = scmp.ne.s32.totalorder %s192, %s194
      %p198 = scmp.eq.s32.totalorder %s22, 0
      %p199 = por %p197, %p198
      %p200 = scmp.ne.s32.totalorder %s192, %s194
      %p201 = scmp.eq.s32.totalorder %s27, 3
      %p202 = por %p200, %p201
      %p203 = scmp.ne.s32.totalorder %s194, %s195
      %p204 = scmp.eq.s32.totalorder %s27, 0
      %p205 = por %p203, %p204
      %p206 = scmp.ne.s32.totalorder %s194, %s195
      %p207 = scmp.eq.s32.totalorder %s28, 3
      %p208 = por %p206, %p207
      %p210 = scmp.ne.s32.totalorder %s195, %s209
      %p211 = scmp.eq.s32.totalorder %s28, 0
      %p212 = por %p210, %p211
      %s213 = ssub.s32 %s29, %s41
      %p214 = scmp.eq.s32.totalorder %s213, 0
      %s216 = sadd.s32 %s215, 1
      %s217 = scalar_select %p214, %s215, %s216
      %p220 = pneg %p214
      %p221 = scmp.eq.s32.totalorder %s22, 3
      %p222 = por %p220, %p221
      %p223 = scmp.ne.s32.totalorder %s215, %s218
      %p224 = scmp.eq.s32.totalorder %s22, 0
      %p225 = por %p223, %p224
      %p226 = scmp.ne.s32.totalorder %s215, %s218
      %p227 = scmp.eq.s32.totalorder %s27, 3
      %p228 = por %p226, %p227
      %p229 = scmp.ne.s32.totalorder %s218, %s219
      %p230 = scmp.eq.s32.totalorder %s27, 0
      %p231 = por %p229, %p230
      %p232 = scmp.ne.s32.totalorder %s218, %s219
      %p233 = scmp.eq.s32.totalorder %s28, 3
      %p234 = por %p232, %p233
      %p236 = scmp.ne.s32.totalorder %s219, %s235
      %p237 = scmp.eq.s32.totalorder %s28, 0
      %p238 = por %p236, %p237
      %p239 = scmp.le.s32.totalorder 1, %s22
      %p240 = scmp.lt.s32.totalorder %s22, 5
      %p241 = pnand %p239, %p240
      %p242 = pneg %p241
      // Predicated region
      $region9: #{tpu_custom_call.1} parent=5 // pred_check
        _
      $region10: #{tpu_custom_call.1} parent=5 // pred_check_branch
        %244 = sbr.rel (%p241) target = $region12
      $region11: #{tpu_custom_call.1} parent=5 // pred_region
        %s245 = ssub.s32 %s22, 1
        // Predicated region
        $region13: #{tpu_custom_call.1} parent=11 // pred_check
          %p246 = pneg %p163
        $region14: #{tpu_custom_call.1} parent=11 // pred_check_branch
          %248 = sbr.rel (%p246) target = $region16
        $region15: #{tpu_custom_call.1} parent=11 // pred_region
          _
        $region16: #{tpu_custom_call.1} parent=11 // pred_fallthru
          _
        // Predicated region
        $region17: #{tpu_custom_call.1} parent=11 // pred_check
          %p249 = pneg %p184
        $region18: #{tpu_custom_call.1} parent=11 // pred_check_branch
          %251 = sbr.rel (%p249) target = $region20
        $region19: #{tpu_custom_call.1} parent=11 // pred_region
          _
        $region20: #{tpu_custom_call.1} parent=11 // pred_fallthru
          _
        // Predicated region
        $region21: #{tpu_custom_call.1} parent=11 // pred_check
          %p252 = pneg %p205
        $region22: #{tpu_custom_call.1} parent=11 // pred_check_branch
          %254 = sbr.rel (%p252) target = $region24
        $region23: #{tpu_custom_call.1} parent=11 // pred_region
          _
        $region24: #{tpu_custom_call.1} parent=11 // pred_fallthru
          _
      $region12: #{tpu_custom_call.1} parent=5 // pred_fallthru
        _
      %p255 = scmp.lt.s32.totalorder %s22, 4
      // Predicated region
      $region25: #{tpu_custom_call.1} parent=5 // pred_check
        %p256 = pneg %p255
      $region26: #{tpu_custom_call.1} parent=5 // pred_check_branch
        %258 = sbr.rel (%p256) target = $region28
      $region27: #{tpu_custom_call.1} parent=5 // pred_region
        // Predicated region
        $region29: #{tpu_custom_call.1} parent=27 // pred_check
          %p259 = pneg %p54
        $region30: #{tpu_custom_call.1} parent=27 // pred_check_branch
          %261 = sbr.rel (%p259) target = $region32
        $region31: #{tpu_custom_call.1} parent=27 // pred_region
          %s262 = sand.u32 %s44, 1
          %s263 = scalar_lea.sflag [#allocation4], %s262
          %s264 = sand.u32 %s44, 1
          %s265 = smul.addr %s264, 4
          %s266 = scalar_lea.vmem [#allocation3], %s265
          %s268 = ssub.s32 64, 64
          %269 = vsyncadd %s263, %s268
          %s270 = smul.addr %s29, 2
          %s271 = smul.addr %s270, 32
          %s272 = scalar_lea.hbm %s0, %s271
          %s274 = sshll.u32 %s266, 4
          %s275 = int_to_ptr.vmem [resolvable:$true] %s274
          %277 = dma.hbm_to_vmem [thread:$0]  %s272, 64, %s275, %s263
        $region32: #{tpu_custom_call.1} parent=27 // pred_fallthru
          _
        // Predicated region
        $region33: #{tpu_custom_call.1} parent=27 // pred_check
          %p278 = pneg %p82
        $region34: #{tpu_custom_call.1} parent=27 // pred_check_branch
          %280 = sbr.rel (%p278) target = $region36
        $region35: #{tpu_custom_call.1} parent=27 // pred_region
          %s281 = sand.u32 %s22, 1
          %s282 = scalar_lea.sflag [#allocation7], %s281
          %s283 = sand.u32 %s72, 1
          %s284 = smul.addr %s283, 2
          %s285 = scalar_lea.vmem [#allocation6], %s284
          %s287 = ssub.s32 32, 32
          %288 = vsyncadd %s282, %s287
          %s289 = smul.addr %s29, 2
          %s290 = sadd.s32 %s30, %s289
          %s291 = smul.addr %s290, 32
          %s292 = scalar_lea.hbm %s1, %s291
          %s294 = sshll.u32 %s285, 4
          %s295 = int_to_ptr.vmem [resolvable:$true] %s294
          %297 = dma.hbm_to_vmem [thread:$0]  %s292, 32, %s295, %s282
        $region36: #{tpu_custom_call.1} parent=27 // pred_fallthru
          _
        // Predicated region
        $region37: #{tpu_custom_call.1} parent=27 // pred_check
          %p298 = pneg %p110
        $region38: #{tpu_custom_call.1} parent=27 // pred_check_branch
          %300 = sbr.rel (%p298) target = $region40
        $region39: #{tpu_custom_call.1} parent=27 // pred_region
          %s301 = sand.u32 %s22, 1
          %s302 = scalar_lea.sflag [#allocation7], %s301
          %s303 = sand.u32 %s100, 1
          %s304 = smul.addr %s303, 2
          %s305 = scalar_lea.vmem [#allocation8], %s304
          %s307 = ssub.s32 32, 32
          %308 = vsyncadd %s302, %s307
          %s309 = smul.addr %s29, 2
          %s310 = sadd.s32 %s30, %s309
          %s311 = smul.addr %s310, 32
          %s312 = scalar_lea.hbm %s2, %s311
          %s314 = sshll.u32 %s305, 4
          %s315 = int_to_ptr.vmem [resolvable:$true] %s314
          %317 = dma.hbm_to_vmem [thread:$0]  %s312, 32, %s315, %s302
        $region40: #{tpu_custom_call.1} parent=27 // pred_fallthru
          _
        // Predicated region
        $region41: #{tpu_custom_call.1} parent=27 // pred_check
          %p318 = pneg %p136
        $region42: #{tpu_custom_call.1} parent=27 // pred_check_branch
          %320 = sbr.rel (%p318) target = $region44
        $region43: #{tpu_custom_call.1} parent=27 // pred_region
          %p321 = scmp.lt.s32.totalorder %s29, 1
          %s322 = scalar_select %p321, %s29, 1
          %s323 = smul.addr %s322, 2
          %s324 = smul.addr %s323, 4
          %s325 = scalar_lea.vmem %s3, %s324
        $region44: #{tpu_custom_call.1} parent=27 // pred_fallthru
          _
      $region28: #{tpu_custom_call.1} parent=5 // pred_fallthru
        _
      %p326 = scmp.le.s32.totalorder 1, %s22
      %p327 = scmp.lt.s32.totalorder %s22, 5
      %p328 = pnand %p326, %p327
      %p329 = pneg %p328
      // Predicated region
      $region45: #{tpu_custom_call.1} parent=5 // pred_check
        _
      $region46: #{tpu_custom_call.1} parent=5 // pred_check_branch
        %331 = sbr.rel (%p328) target = $region48
      $region47: #{tpu_custom_call.1} parent=5 // pred_region
        %s332 = ssub.s32 %s22, 1
        %s333 = sand.u32 %s47, 1
        %s334 = scalar_lea.sflag [#allocation4], %s333
        %s335 = sand.u32 %s47, 1
        %s336 = smul.addr %s335, 4
        %s337 = scalar_lea.vmem [#allocation3], %s336
        // Predicated region
        $region49: #{tpu_custom_call.1} parent=47 // pred_check
          %p338 = pneg %p60
        $region50: #{tpu_custom_call.1} parent=47 // pred_check_branch
          %340 = sbr.rel (%p338) target = $region52
        $region51: #{tpu_custom_call.1} parent=47 // pred_region
          %341 = dma.done %s334, 64
        $region52: #{tpu_custom_call.1} parent=47 // pred_fallthru
          _
        %s342 = sand.u32 %s27, 1
        %s343 = scalar_lea.sflag [#allocation7], %s342
        %s344 = sand.u32 %s75, 1
        %s345 = smul.addr %s344, 2
        %s346 = scalar_lea.vmem [#allocation6], %s345
        // Predicated region
        $region53: #{tpu_custom_call.1} parent=47 // pred_check
          %p347 = pneg %p88
        $region54: #{tpu_custom_call.1} parent=47 // pred_check_branch
          %349 = sbr.rel (%p347) target = $region56
        $region55: #{tpu_custom_call.1} parent=47 // pred_region
          %350 = dma.done %s343, 32
        $region56: #{tpu_custom_call.1} parent=47 // pred_fallthru
          _
        %s351 = sand.u32 %s27, 1
        %s352 = scalar_lea.sflag [#allocation7], %s351
        %s353 = sand.u32 %s103, 1
        %s354 = smul.addr %s353, 2
        %s355 = scalar_lea.vmem [#allocation8], %s354
        // Predicated region
        $region57: #{tpu_custom_call.1} parent=47 // pred_check
          %p356 = pneg %p116
        $region58: #{tpu_custom_call.1} parent=47 // pred_check_branch
          %358 = sbr.rel (%p356) target = $region60
        $region59: #{tpu_custom_call.1} parent=47 // pred_region
          %359 = dma.done %s352, 32
        $region60: #{tpu_custom_call.1} parent=47 // pred_fallthru
          _
        %s360 = sand.u32 %s47, 1
        %s361 = scalar_lea.sflag [#allocation4], %s360
        %s362 = sand.u32 %s47, 1
        %s363 = smul.addr %s362, 4
        %s364 = scalar_lea.vmem [#allocation3], %s363
        %p365 = pneg %p60
        %p366 = pneg %p57
        %s367 = sand.u32 %s27, 1
        %s368 = scalar_lea.sflag [#allocation7], %s367
        %s369 = sand.u32 %s75, 1
        %s370 = smul.addr %s369, 2
        %s371 = scalar_lea.vmem [#allocation6], %s370
        %p372 = pneg %p88
        %p373 = pneg %p85
        %s374 = sand.u32 %s27, 1
        %s375 = scalar_lea.sflag [#allocation7], %s374
        %s376 = sand.u32 %s103, 1
        %s377 = smul.addr %s376, 2
        %s378 = scalar_lea.vmem [#allocation8], %s377
        %p379 = pneg %p116
        %p380 = pneg %p113
        %p381 = scmp.lt.s32.totalorder %s31, 1
        %s382 = scalar_select %p381, %s31, 1
        %s383 = smul.addr %s382, 2
        %s384 = smul.addr %s383, 4
        %s385 = scalar_lea.vmem %s3, %s384
        %p386 = pneg %p142
        %p387 = pneg %p139
        %p388 = pneg %p163
        %p389 = pneg %p160
        %p390 = pneg %p184
        %p391 = pneg %p181
        %p392 = pneg %p205
        %p393 = pneg %p202
        %p394 = pneg %p231
        %p395 = pneg %p228
        %s396 = sand.u32 %s218, 1
        %s397 = scalar_lea.sflag [#allocation5], %s396
        %s398 = sand.u32 %s218, 1
        %s399 = smul.addr %s398, 8
        %s400 = scalar_lea.vmem [#allocation9], %s399
        %p401 = scmp.lt.s32.totalorder %s31, 1
        %s402 = scalar_select %p401, %s31, 1
        %s403 = smul.addr %s402, 2
        %s404 = smul.addr %s403, 4
        %s405 = scalar_lea.vmem %s3, %s404
        %p407 = scmp.eq.s32.totalorder %s32, 0
        // Predicated region
        $region61: #{tpu_custom_call.1} parent=47 // pred_check
          %p408 = pneg %p407
        $region62: #{tpu_custom_call.1} parent=47 // pred_check_branch
          %410 = sbr.rel (%p408) target = $region64
        $region63: #{tpu_custom_call.1} parent=47 // pred_region
          %411 = vst [vmem:[#allocation2] sm:$0xff] 0.0
          %412 = vst [vmem:[#allocation2 + $0x8] sm:$0xff] 0.0
          %413 = vst [vmem:[#allocation2 + $0x10] sm:$0xff] 0.0
          %414 = vst [vmem:[#allocation2 + $0x18] sm:$0xff] 0.0
          %415 = vst [vmem:[#allocation2 + $0x20] sm:$0xff] 0.0
          %416 = vst [vmem:[#allocation2 + $0x28] sm:$0xff] 0.0
          %417 = vst [vmem:[#allocation2 + $0x30] sm:$0xff] 0.0
          %418 = vst [vmem:[#allocation2 + $0x38] sm:$0xff] 0.0
        $region64: #{tpu_custom_call.1} parent=47 // pred_fallthru
          _
        %v419 = vld [vmem:[%s337] sm:$0xf]
        %v420 = vld [vmem:[%s346] sm:$0x3]
        %v421 = vld [vmem:[%s355] sm:$0x3]
        %v422 = vld [vmem:[%s4] sm:$0x3]
        %vm423 = vcmask 31744
        %v425 = vsel %vm423, %v422, 0
        %vm427 = vcmask 1041408
        %v429 = vsel %vm427, %v420, 0
        %431 = vmatprep.subr.bf16.mxu0 0
        %432 = vmatpush1.bf16.msra.mxu0 0
        %433 = vmatprep.subr.bf16.mxu0 0
        %434 = vmatpush1.bf16.msra.mxu0 0
        %435 = vmatprep.subr.bf16.mxu0 0
        %436 = vmatpush1.bf16.msra.mxu0 0
        %437 = vmatprep.subr.bf16.mxu0 0
        %438 = vmatpush1.bf16.msra.mxu0 0
        %439 = vmatprep.subr.bf16.mxu0 0
        %440 = vmatpush1.bf16.msra.mxu0 0
        %441 = vmatprep.subr.bf16.mxu0 0
        %442 = vmatpush1.bf16.msra.mxu0 0
        %443 = vmatprep.subr.bf16.mxu0 0
        %444 = vmatpush1.bf16.msra.mxu0 0
        %445 = vmatprep.subr.bf16.mxu0 0
        %446 = vmatpush1.bf16.msra.mxu0 %v429
        %447 = vmatprep.subr.bf16.mxu0 0
        %448 = vmatpush2.bf16.msra.mxu0 0
        %449 = vmatprep.subr.bf16.mxu0 0
        %450 = vmatpush2.bf16.msra.mxu0 0
        %451 = vmatprep.subr.bf16.mxu0 0
        %452 = vmatpush2.bf16.msra.mxu0 0
        %453 = vmatprep.subr.bf16.mxu0 0
        %454 = vmatpush2.bf16.msra.mxu0 0
        %455 = vmatprep.subr.bf16.mxu0 0
        %456 = vmatpush2.bf16.msra.mxu0 0
        %457 = vmatprep.subr.bf16.mxu0 0
        %458 = vmatpush2.bf16.msra.mxu0 0
        %459 = vmatprep.subr.bf16.mxu0 0
        %460 = vmatpush2.bf16.msra.mxu0 0
        %461 = vmatprep.subr.bf16.mxu0 0
        %462 = vmatpush2.bf16.msra.mxu0 0
        %463 = vmatprep.mubr.bf16.mxu0 0
        %464 = vmatmul.mubr.bf16.gmra.mxu0 %v425
        %v465 = vpop.f32.mrf.mxu0
        %v466 = vadd.f32 0.0, %v465
        %v467 = vpop.f32.mrf.mxu0
        %v468 = vpop.f32.mrf.mxu0
        %v469 = vpop.f32.mrf.mxu0
        %470 = vdwg.mxu0
        %v471 = vpack.c.bf16 %v466, %v466
        %472 = vxpose.xlu0.c.b16.start [1/8] %v471, 128
        %473 = vxpose.xlu0.c.b16.cont [2/8] 0, 128
        %474 = vxpose.xlu0.c.b16.cont [3/8] 0, 128
        %475 = vxpose.xlu0.c.b16.cont [4/8] 0, 128
        %476 = vxpose.xlu0.c.b16.cont [5/8] 0, 128
        %477 = vxpose.xlu0.c.b16.cont [6/8] 0, 128
        %478 = vxpose.xlu0.c.b16.cont [7/8] 0, 128
        %479 = vxpose.xlu0.c.b16.end [8/8] 0, 128
        %v480 = vpop.trf.xlu0
        %v481 = vpop.trf.xlu0
        %v482 = vpop.trf.xlu0
        %v483 = vpop.trf.xlu0
        %v484 = vpop.trf.xlu0
        %v485 = vpop.trf.xlu0
        %v486 = vpop.trf.xlu0
        %v487 = vpop.trf.xlu0
        %v490 = vunpack.c.l.s4 1983009808
        %v491 = vunpack.c.0.s8 %v490
        %v492 = vlaneseq
        %v493 = vshrl.u32 %v492, 7
        %v494 = vsub.s32 %v491, %v493
        %v495 = vrot.slane %v419, %v494
        %v496 = vcombine.high %v495, %v495
        %v498 = vsel %vm423, %v480, 0
        %v501 = vsel %vm423, %v481, 0
        %v504 = vsel %vm423, %v482, 0
        %v507 = vsel %vm423, %v483, 0
        %v510 = vsel %vm423, %v484, 0
        %v513 = vsel %vm423, %v485, 0
        %v516 = vsel %vm423, %v486, 0
        %v519 = vsel %vm423, %v487, 0
        %v522 = vsel %vm427, %v495, 0
        %v525 = vsel %vm427, %v496, 0
        %527 = vmatprep.subr.bf16.mxu0 0
        %528 = vmatpush1.bf16.msra.mxu0 0
        %529 = vmatprep.subr.bf16.mxu0 0
        %530 = vmatpush1.bf16.msra.mxu0 0
        %531 = vmatprep.subr.bf16.mxu0 0
        %532 = vmatpush1.bf16.msra.mxu0 0
        %533 = vmatprep.subr.bf16.mxu0 0
        %534 = vmatpush1.bf16.msra.mxu0 0
        %535 = vmatprep.subr.bf16.mxu0 0
        %536 = vmatpush1.bf16.msra.mxu0 0
        %537 = vmatprep.subr.bf16.mxu0 0
        %538 = vmatpush1.bf16.msra.mxu0 0
        %539 = vmatprep.subr.bf16.mxu0 0
        %540 = vmatpush1.bf16.msra.mxu0 0
        %541 = vmatprep.subr.bf16.mxu0 %v525
        %542 = vmatpush1.bf16.msra.mxu0 %v522
        %543 = vmatprep.subr.bf16.mxu0 0
        %544 = vmatpush2.bf16.msra.mxu0 0
        %545 = vmatprep.subr.bf16.mxu0 0
        %546 = vmatpush2.bf16.msra.mxu0 0
        %547 = vmatprep.subr.bf16.mxu0 0
        %548 = vmatpush2.bf16.msra.mxu0 0
        %549 = vmatprep.subr.bf16.mxu0 0
        %550 = vmatpush2.bf16.msra.mxu0 0
        %551 = vmatprep.subr.bf16.mxu0 0
        %552 = vmatpush2.bf16.msra.mxu0 0
        %553 = vmatprep.subr.bf16.mxu0 0
        %554 = vmatpush2.bf16.msra.mxu0 0
        %555 = vmatprep.subr.bf16.mxu0 0
        %556 = vmatpush2.bf16.msra.mxu0 0
        %557 = vmatprep.subr.bf16.mxu0 0
        %558 = vmatpush2.bf16.msra.mxu0 0
        %559 = vmatprep.mubr.bf16.mxu0 0
        %560 = vmatmul.mubr.bf16.gmra.mxu0 %v498
        %v561 = vpop.f32.mrf.mxu0
        %v562 = vadd.f32 0.0, %v561
        %v563 = vpop.f32.mrf.mxu0
        %v564 = vadd.f32 0.0, %v563
        %v565 = vpop.f32.mrf.mxu0
        %v566 = vadd.f32 0.0, %v565
        %v567 = vpop.f32.mrf.mxu0
        %v568 = vadd.f32 0.0, %v567
        %569 = vmatprep.mubr.bf16.mxu0 0
        %570 = vmatmul.mubr.bf16.gmra.mxu0 %v501
        %v571 = vpop.f32.mrf.mxu0
        %v572 = vadd.f32 0.0, %v571
        %v573 = vpop.f32.mrf.mxu0
        %v574 = vadd.f32 0.0, %v573
        %v575 = vpop.f32.mrf.mxu0
        %v576 = vadd.f32 0.0, %v575
        %v577 = vpop.f32.mrf.mxu0
        %v578 = vadd.f32 0.0, %v577
        %579 = vmatprep.mubr.bf16.mxu0 0
        %580 = vmatmul.mubr.bf16.gmra.mxu0 %v504
        %v581 = vpop.f32.mrf.mxu0
        %v582 = vadd.f32 0.0, %v581
        %v583 = vpop.f32.mrf.mxu0
        %v584 = vadd.f32 0.0, %v583
        %v585 = vpop.f32.mrf.mxu0
        %v586 = vadd.f32 0.0, %v585
        %v587 = vpop.f32.mrf.mxu0
        %v588 = vadd.f32 0.0, %v587
        %589 = vmatprep.mubr.bf16.mxu0 0
        %590 = vmatmul.mubr.bf16.gmra.mxu0 %v507
        %v591 = vpop.f32.mrf.mxu0
        %v592 = vadd.f32 0.0, %v591
        %v593 = vpop.f32.mrf.mxu0
        %v594 = vadd.f32 0.0, %v593
        %v595 = vpop.f32.mrf.mxu0
        %v596 = vadd.f32 0.0, %v595
        %v597 = vpop.f32.mrf.mxu0
        %v598 = vadd.f32 0.0, %v597
        %599 = vmatprep.mubr.bf16.mxu0 0
        %600 = vmatmul.mubr.bf16.gmra.mxu0 %v510
        %v601 = vpop.f32.mrf.mxu0
        %v602 = vadd.f32 0.0, %v601
        %v603 = vpop.f32.mrf.mxu0
        %v604 = vadd.f32 0.0, %v603
        %v605 = vpop.f32.mrf.mxu0
        %v606 = vadd.f32 0.0, %v605
        %v607 = vpop.f32.mrf.mxu0
        %v608 = vadd.f32 0.0, %v607
        %609 = vmatprep.mubr.bf16.mxu0 0
        %610 = vmatmul.mubr.bf16.gmra.mxu0 %v513
        %v611 = vpop.f32.mrf.mxu0
        %v612 = vadd.f32 0.0, %v611
        %v613 = vpop.f32.mrf.mxu0
        %v614 = vadd.f32 0.0, %v613
        %v615 = vpop.f32.mrf.mxu0
        %v616 = vadd.f32 0.0, %v615
        %v617 = vpop.f32.mrf.mxu0
        %v618 = vadd.f32 0.0, %v617
        %619 = vmatprep.mubr.bf16.mxu0 0
        %620 = vmatmul.mubr.bf16.gmra.mxu0 %v516
        %v621 = vpop.f32.mrf.mxu0
        %v622 = vadd.f32 0.0, %v621
        %v623 = vpop.f32.mrf.mxu0
        %v624 = vadd.f32 0.0, %v623
        %v625 = vpop.f32.mrf.mxu0
        %v626 = vadd.f32 0.0, %v625
        %v627 = vpop.f32.mrf.mxu0
        %v628 = vadd.f32 0.0, %v627
        %629 = vmatprep.mubr.bf16.mxu0 0
        %630 = vmatmul.mubr.bf16.gmra.mxu0 %v519
        %v631 = vpop.f32.mrf.mxu0
        %v632 = vadd.f32 0.0, %v631
        %v633 = vpop.f32.mrf.mxu0
        %v634 = vadd.f32 0.0, %v633
        %v635 = vpop.f32.mrf.mxu0
        %v636 = vadd.f32 0.0, %v635
        %v637 = vpop.f32.mrf.mxu0
        %v638 = vadd.f32 0.0, %v637
        %639 = vdwg.mxu0
        %v640 = vmax.f32 %v562, %v564
        %641 = vmax.xlane.f32.xlu0 %v640
        %v642 = vpop.xlane.xlu0 %641
        %v643 = vmax.f32 %v566, %v568
        %644 = vmax.xlane.f32.xlu0 %v643
        %v645 = vpop.xlane.xlu0 %644
        %v646 = vmax.f32 %v572, %v574
        %647 = vmax.xlane.f32.xlu0 %v646
        %v648 = vpop.xlane.xlu0 %647
        %v649 = vmax.f32 %v576, %v578
        %650 = vmax.xlane.f32.xlu0 %v649
        %v651 = vpop.xlane.xlu0 %650
        %v652 = vmax.f32 %v582, %v584
        %653 = vmax.xlane.f32.xlu0 %v652
        %v654 = vpop.xlane.xlu0 %653
        %v655 = vmax.f32 %v586, %v588
        %656 = vmax.xlane.f32.xlu0 %v655
        %v657 = vpop.xlane.xlu0 %656
        %v658 = vmax.f32 %v592, %v594
        %659 = vmax.xlane.f32.xlu0 %v658
        %v660 = vpop.xlane.xlu0 %659
        %v661 = vmax.f32 %v596, %v598
        %662 = vmax.xlane.f32.xlu0 %v661
        %v663 = vpop.xlane.xlu0 %662
        %v664 = vmax.f32 %v602, %v604
        %665 = vmax.xlane.f32.xlu0 %v664
        %v666 = vpop.xlane.xlu0 %665
        %v667 = vmax.f32 %v606, %v608
        %668 = vmax.xlane.f32.xlu0 %v667
        %v669 = vpop.xlane.xlu0 %668
        %v670 = vmax.f32 %v612, %v614
        %671 = vmax.xlane.f32.xlu0 %v670
        %v672 = vpop.xlane.xlu0 %671
        %v673 = vmax.f32 %v616, %v618
        %674 = vmax.xlane.f32.xlu0 %v673
        %v675 = vpop.xlane.xlu0 %674
        %v676 = vmax.f32 %v622, %v624
        %677 = vmax.xlane.f32.xlu0 %v676
        %v678 = vpop.xlane.xlu0 %677
        %v679 = vmax.f32 %v626, %v628
        %680 = vmax.xlane.f32.xlu0 %v679
        %v681 = vpop.xlane.xlu0 %680
        %v682 = vmax.f32 %v632, %v634
        %683 = vmax.xlane.f32.xlu0 %v682
        %v684 = vpop.xlane.xlu0 %683
        %v685 = vmax.f32 %v636, %v638
        %686 = vmax.xlane.f32.xlu0 %v685
        %v687 = vpop.xlane.xlu0 %686
        %v688 = vsub.f32 %v562, %v642
        %v689 = vsub.f32 %v564, %v642
        %v690 = vsub.f32 %v566, %v645
        %v691 = vsub.f32 %v568, %v645
        %v692 = vsub.f32 %v572, %v648
        %v693 = vsub.f32 %v574, %v648
        %v694 = vsub.f32 %v576, %v651
        %v695 = vsub.f32 %v578, %v651
        %v696 = vsub.f32 %v582, %v654
        %v697 = vsub.f32 %v584, %v654
        %v698 = vsub.f32 %v586, %v657
        %v699 = vsub.f32 %v588, %v657
        %v700 = vsub.f32 %v592, %v660
        %v701 = vsub.f32 %v594, %v660
        %v702 = vsub.f32 %v596, %v663
        %v703 = vsub.f32 %v598, %v663
        %v704 = vsub.f32 %v602, %v666
        %v705 = vsub.f32 %v604, %v666
        %v706 = vsub.f32 %v606, %v669
        %v707 = vsub.f32 %v608, %v669
        %v708 = vsub.f32 %v612, %v672
        %v709 = vsub.f32 %v614, %v672
        %v710 = vsub.f32 %v616, %v675
        %v711 = vsub.f32 %v618, %v675
        %v712 = vsub.f32 %v622, %v678
        %v713 = vsub.f32 %v624, %v678
        %v714 = vsub.f32 %v626, %v681
        %v715 = vsub.f32 %v628, %v681
        %v716 = vsub.f32 %v632, %v684
        %v717 = vsub.f32 %v634, %v684
        %v718 = vsub.f32 %v636, %v687
        %v719 = vsub.f32 %v638, %v687
        %v720 = vpack.c.bf16 %v690, %v688
        %v721 = vpack.c.bf16 %v691, %v689
        %v722 = vpack.c.bf16 %v694, %v692
        %v723 = vpack.c.bf16 %v695, %v693
        %v724 = vpack.c.bf16 %v698, %v696
        %v725 = vpack.c.bf16 %v699, %v697
        %v726 = vpack.c.bf16 %v702, %v700
        %v727 = vpack.c.bf16 %v703, %v701
        %v728 = vpack.c.bf16 %v706, %v704
        %v729 = vpack.c.bf16 %v707, %v705
        %v730 = vpack.c.bf16 %v710, %v708
        %v731 = vpack.c.bf16 %v711, %v709
        %v732 = vpack.c.bf16 %v714, %v712
        %v733 = vpack.c.bf16 %v715, %v713
        %v734 = vpack.c.bf16 %v718, %v716
        %v735 = vpack.c.bf16 %v719, %v717
        %v737 = vmul.bf16 %v720, 1069105081
        %v738 = vpow.bf16.pop %v737
        %v740 = vmul.bf16 %v721, 1069105081
        %v741 = vpow.bf16.pop %v740
        %v743 = vmul.bf16 %v722, 1069105081
        %v744 = vpow.bf16.pop %v743
        %v746 = vmul.bf16 %v723, 1069105081
        %v747 = vpow.bf16.pop %v746
        %v749 = vmul.bf16 %v724, 1069105081
        %v750 = vpow.bf16.pop %v749
        %v752 = vmul.bf16 %v725, 1069105081
        %v753 = vpow.bf16.pop %v752
        %v755 = vmul.bf16 %v726, 1069105081
        %v756 = vpow.bf16.pop %v755
        %v758 = vmul.bf16 %v727, 1069105081
        %v759 = vpow.bf16.pop %v758
        %v761 = vmul.bf16 %v728, 1069105081
        %v762 = vpow.bf16.pop %v761
        %v764 = vmul.bf16 %v729, 1069105081
        %v765 = vpow.bf16.pop %v764
        %v767 = vmul.bf16 %v730, 1069105081
        %v768 = vpow.bf16.pop %v767
        %v770 = vmul.bf16 %v731, 1069105081
        %v771 = vpow.bf16.pop %v770
        %v773 = vmul.bf16 %v732, 1069105081
        %v774 = vpow.bf16.pop %v773
        %v776 = vmul.bf16 %v733, 1069105081
        %v777 = vpow.bf16.pop %v776
        %v779 = vmul.bf16 %v734, 1069105081
        %v780 = vpow.bf16.pop %v779
        %v782 = vmul.bf16 %v735, 1069105081
        %v783 = vpow.bf16.pop %v782
        %v784 = vunpack.c.l.bf16 %v738
        %v785 = vunpack.c.l.bf16 %v741
        %v786 = vunpack.c.h.bf16 %v738
        %v787 = vunpack.c.h.bf16 %v741
        %v788 = vunpack.c.l.bf16 %v744
        %v789 = vunpack.c.l.bf16 %v747
        %v790 = vunpack.c.h.bf16 %v744
        %v791 = vunpack.c.h.bf16 %v747
        %v792 = vunpack.c.l.bf16 %v750
        %v793 = vunpack.c.l.bf16 %v753
        %v794 = vunpack.c.h.bf16 %v750
        %v795 = vunpack.c.h.bf16 %v753
        %v796 = vunpack.c.l.bf16 %v756
        %v797 = vunpack.c.l.bf16 %v759
        %v798 = vunpack.c.h.bf16 %v756
        %v799 = vunpack.c.h.bf16 %v759
        %v800 = vunpack.c.l.bf16 %v762
        %v801 = vunpack.c.l.bf16 %v765
        %v802 = vunpack.c.h.bf16 %v762
        %v803 = vunpack.c.h.bf16 %v765
        %v804 = vunpack.c.l.bf16 %v768
        %v805 = vunpack.c.l.bf16 %v771
        %v806 = vunpack.c.h.bf16 %v768
        %v807 = vunpack.c.h.bf16 %v771
        %v808 = vunpack.c.l.bf16 %v774
        %v809 = vunpack.c.l.bf16 %v777
        %v810 = vunpack.c.h.bf16 %v774
        %v811 = vunpack.c.h.bf16 %v777
        %v812 = vunpack.c.l.bf16 %v780
        %v813 = vunpack.c.l.bf16 %v783
        %v814 = vunpack.c.h.bf16 %v780
        %v815 = vunpack.c.h.bf16 %v783
        %v816 = vadd.f32 %v784, %v785
        %817 = vadd.xlane.f32.xlu0 %v816
        %v818 = vpop.xlane.xlu0 %817
        %v819 = vadd.f32 %v786, %v787
        %820 = vadd.xlane.f32.xlu0 %v819
        %v821 = vpop.xlane.xlu0 %820
        %v822 = vadd.f32 %v788, %v789
        %823 = vadd.xlane.f32.xlu0 %v822
        %v824 = vpop.xlane.xlu0 %823
        %v825 = vadd.f32 %v790, %v791
        %826 = vadd.xlane.f32.xlu0 %v825
        %v827 = vpop.xlane.xlu0 %826
        %v828 = vadd.f32 %v792, %v793
        %829 = vadd.xlane.f32.xlu0 %v828
        %v830 = vpop.xlane.xlu0 %829
        %v831 = vadd.f32 %v794, %v795
        %832 = vadd.xlane.f32.xlu0 %v831
        %v833 = vpop.xlane.xlu0 %832
        %v834 = vadd.f32 %v796, %v797
        %835 = vadd.xlane.f32.xlu0 %v834
        %v836 = vpop.xlane.xlu0 %835
        %v837 = vadd.f32 %v798, %v799
        %838 = vadd.xlane.f32.xlu0 %v837
        %v839 = vpop.xlane.xlu0 %838
        %v840 = vadd.f32 %v800, %v801
        %841 = vadd.xlane.f32.xlu0 %v840
        %v842 = vpop.xlane.xlu0 %841
        %v843 = vadd.f32 %v802, %v803
        %844 = vadd.xlane.f32.xlu0 %v843
        %v845 = vpop.xlane.xlu0 %844
        %v846 = vadd.f32 %v804, %v805
        %847 = vadd.xlane.f32.xlu0 %v846
        %v848 = vpop.xlane.xlu0 %847
        %v849 = vadd.f32 %v806, %v807
        %850 = vadd.xlane.f32.xlu0 %v849
        %v851 = vpop.xlane.xlu0 %850
        %v852 = vadd.f32 %v808, %v809
        %853 = vadd.xlane.f32.xlu0 %v852
        %v854 = vpop.xlane.xlu0 %853
        %v855 = vadd.f32 %v810, %v811
        %856 = vadd.xlane.f32.xlu0 %v855
        %v857 = vpop.xlane.xlu0 %856
        %v858 = vadd.f32 %v812, %v813
        %859 = vadd.xlane.f32.xlu0 %v858
        %v860 = vpop.xlane.xlu0 %859
        %v861 = vadd.f32 %v814, %v815
        %862 = vadd.xlane.f32.xlu0 %v861
        %v863 = vpop.xlane.xlu0 %862
        %v864 = vrcp.pop %v818
        %v865 = vrcp.pop %v821
        %v866 = vrcp.pop %v824
        %v867 = vrcp.pop %v827
        %v868 = vrcp.pop %v830
        %v869 = vrcp.pop %v833
        %v870 = vrcp.pop %v836
        %v871 = vrcp.pop %v839
        %v872 = vrcp.pop %v842
        %v873 = vrcp.pop %v845
        %v874 = vrcp.pop %v848
        %v875 = vrcp.pop %v851
        %v876 = vrcp.pop %v854
        %v877 = vrcp.pop %v857
        %v878 = vrcp.pop %v860
        %v879 = vrcp.pop %v863
        %v880 = vpack.c.bf16 %v865, %v864
        %v881 = vpack.c.bf16 %v867, %v866
        %v882 = vpack.c.bf16 %v869, %v868
        %v883 = vpack.c.bf16 %v871, %v870
        %v884 = vpack.c.bf16 %v873, %v872
        %v885 = vpack.c.bf16 %v875, %v874
        %v886 = vpack.c.bf16 %v877, %v876
        %v887 = vpack.c.bf16 %v879, %v878
        %v888 = vmul.bf16 %v738, %v880
        %v889 = vmul.bf16 %v741, %v880
        %v890 = vmul.bf16 %v744, %v881
        %v891 = vmul.bf16 %v747, %v881
        %v892 = vmul.bf16 %v750, %v882
        %v893 = vmul.bf16 %v753, %v882
        %v894 = vmul.bf16 %v756, %v883
        %v895 = vmul.bf16 %v759, %v883
        %v896 = vmul.bf16 %v762, %v884
        %v897 = vmul.bf16 %v765, %v884
        %v898 = vmul.bf16 %v768, %v885
        %v899 = vmul.bf16 %v771, %v885
        %v900 = vmul.bf16 %v774, %v886
        %v901 = vmul.bf16 %v777, %v886
        %v902 = vmul.bf16 %v780, %v887
        %v903 = vmul.bf16 %v783, %v887
        %v904 = vld [vmem:[%s5] sm:$0xf]
        %v905 = vld [vmem:[%s5 + $0x4] sm:$0xf]
        %v906 = vld [vmem:[%s5 + $0x8] sm:$0xf]
        %v907 = vld [vmem:[%s5 + $0xc] sm:$0xf]
        %v912 = vunpack.c.l.b16 %v904
        %v913 = vunpack.c.l.b16 %v905
        %v914 = vunpack.c.l.b16 %v906
        %v915 = vunpack.c.l.b16 %v907
        %v916 = vpack.c.b16 %v913, %v912
        %v917 = vpack.c.b16 %v915, %v914
        %v919 = vsel %vm423, %v916, 0
        %v922 = vsel %vm423, %v917, 0
        %v925 = vsel %vm427, %v421, 0
        %927 = vmatprep.subr.bf16.mxu0 0
        %928 = vmatpush1.bf16.msra.mxu0 0
        %929 = vmatprep.subr.bf16.mxu0 0
        %930 = vmatpush1.bf16.msra.mxu0 0
        %931 = vmatprep.subr.bf16.mxu0 0
        %932 = vmatpush1.bf16.msra.mxu0 0
        %933 = vmatprep.subr.bf16.mxu0 0
        %934 = vmatpush1.bf16.msra.mxu0 0
        %935 = vmatprep.subr.bf16.mxu0 0
        %936 = vmatpush1.bf16.msra.mxu0 0
        %937 = vmatprep.subr.bf16.mxu0 0
        %938 = vmatpush1.bf16.msra.mxu0 0
        %939 = vmatprep.subr.bf16.mxu0 0
        %940 = vmatpush1.bf16.msra.mxu0 0
        %941 = vmatprep.subr.bf16.mxu0 0
        %942 = vmatpush1.bf16.msra.mxu0 %v925
        %943 = vmatprep.subr.bf16.mxu0 0
        %944 = vmatpush2.bf16.msra.mxu0 0
        %945 = vmatprep.subr.bf16.mxu0 0
        %946 = vmatpush2.bf16.msra.mxu0 0
        %947 = vmatprep.subr.bf16.mxu0 0
        %948 = vmatpush2.bf16.msra.mxu0 0
        %949 = vmatprep.subr.bf16.mxu0 0
        %950 = vmatpush2.bf16.msra.mxu0 0
        %951 = vmatprep.subr.bf16.mxu0 0
        %952 = vmatpush2.bf16.msra.mxu0 0
        %953 = vmatprep.subr.bf16.mxu0 0
        %954 = vmatpush2.bf16.msra.mxu0 0
        %955 = vmatprep.subr.bf16.mxu0 0
        %956 = vmatpush2.bf16.msra.mxu0 0
        %957 = vmatprep.subr.bf16.mxu0 0
        %958 = vmatpush2.bf16.msra.mxu0 0
        %959 = vmatprep.mubr.bf16.mxu0 0
        %960 = vmatmul.mubr.bf16.gmra.mxu0 %v919
        %v961 = vpop.f32.mrf.mxu0
        %v962 = vadd.f32 0.0, %v961
        %v963 = vpop.f32.mrf.mxu0
        %v964 = vpop.f32.mrf.mxu0
        %v965 = vadd.f32 0.0, %v964
        %v966 = vpop.f32.mrf.mxu0
        %967 = vmatprep.mubr.bf16.mxu0 0
        %968 = vmatmul.mubr.bf16.gmra.mxu0 %v922
        %v969 = vpop.f32.mrf.mxu0
        %v970 = vadd.f32 0.0, %v969
        %v971 = vpop.f32.mrf.mxu0
        %v972 = vpop.f32.mrf.mxu0
        %v973 = vadd.f32 0.0, %v972
        %v974 = vpop.f32.mrf.mxu0
        %975 = vdwg.mxu0
        %v976 = vpack.c.bf16 %v965, %v962
        %v977 = vpack.c.bf16 %v973, %v970
        %v978 = vld [vmem:[#allocation2] sm:$0xff]
        %v979 = vld [vmem:[#allocation2 + $0x8] sm:$0xff]
        %v980 = vld [vmem:[#allocation2 + $0x10] sm:$0xff]
        %v981 = vld [vmem:[#allocation2 + $0x18] sm:$0xff]
        %v982 = vld [vmem:[#allocation2 + $0x20] sm:$0xff]
        %v983 = vld [vmem:[#allocation2 + $0x28] sm:$0xff]
        %v984 = vld [vmem:[#allocation2 + $0x30] sm:$0xff]
        %v985 = vld [vmem:[#allocation2 + $0x38] sm:$0xff]
        %986 = vmatprep.subr.bf16.mxu0 %v903
        %987 = vmatpush1.bf16.msra.mxu0 %v902
        %988 = vmatprep.subr.bf16.mxu0 %v901
        %989 = vmatpush1.bf16.msra.mxu0 %v900
        %990 = vmatprep.subr.bf16.mxu0 %v899
        %991 = vmatpush1.bf16.msra.mxu0 %v898
        %992 = vmatprep.subr.bf16.mxu0 %v897
        %993 = vmatpush1.bf16.msra.mxu0 %v896
        %994 = vmatprep.subr.bf16.mxu0 %v895
        %995 = vmatpush1.bf16.msra.mxu0 %v894
        %996 = vmatprep.subr.bf16.mxu0 %v893
        %997 = vmatpush1.bf16.msra.mxu0 %v892
        %998 = vmatprep.subr.bf16.mxu0 %v891
        %999 = vmatpush1.bf16.msra.mxu0 %v890
        %1000 = vmatprep.subr.bf16.mxu0 %v889
        %1001 = vmatpush1.bf16.msra.mxu0 %v888
        %1002 = vmatprep.subr.bf16.mxu0 0
        %1003 = vmatpush2.bf16.msra.mxu0 0
        %1004 = vmatprep.subr.bf16.mxu0 0
        %1005 = vmatpush2.bf16.msra.mxu0 0
        %1006 = vmatprep.subr.bf16.mxu0 0
        %1007 = vmatpush2.bf16.msra.mxu0 0
        %1008 = vmatprep.subr.bf16.mxu0 0
        %1009 = vmatpush2.bf16.msra.mxu0 0
        %1010 = vmatprep.subr.bf16.mxu0 0
        %1011 = vmatpush2.bf16.msra.mxu0 0
        %1012 = vmatprep.subr.bf16.mxu0 0
        %1013 = vmatpush2.bf16.msra.mxu0 0
        %1014 = vmatprep.subr.bf16.mxu0 0
        %1015 = vmatpush2.bf16.msra.mxu0 0
        %1016 = vmatprep.subr.bf16.mxu0 0
        %1017 = vmatpush2.bf16.msra.mxu0 0
        %1018 = vmatprep.mubr.bf16.mxu0 0
        %1019 = vmatmul.mubr.bf16.gmra.mxu0 %v976
        %v1020 = vpop.f32.mrf.mxu0
        %v1021 = vadd.f32 0.0, %v1020
        %v1022 = vpop.f32.mrf.mxu0
        %v1023 = vadd.f32 0.0, %v1022
        %v1024 = vpop.f32.mrf.mxu0
        %v1025 = vadd.f32 0.0, %v1024
        %v1026 = vpop.f32.mrf.mxu0
        %v1027 = vadd.f32 0.0, %v1026
        %1028 = vmatprep.mubr.bf16.mxu0 0
        %1029 = vmatmul.mubr.bf16.gmra.mxu0 %v977
        %v1030 = vpop.f32.mrf.mxu0
        %v1031 = vadd.f32 0.0, %v1030
        %v1032 = vpop.f32.mrf.mxu0
        %v1033 = vadd.f32 0.0, %v1032
        %v1034 = vpop.f32.mrf.mxu0
        %v1035 = vadd.f32 0.0, %v1034
        %v1036 = vpop.f32.mrf.mxu0
        %v1037 = vadd.f32 0.0, %v1036
        %1038 = vdwg.mxu0
        %v1039 = vadd.f32 %v978, %v1021
        %v1040 = vadd.f32 %v979, %v1023
        %v1041 = vadd.f32 %v980, %v1025
        %v1042 = vadd.f32 %v981, %v1027
        %v1043 = vadd.f32 %v982, %v1031
        %v1044 = vadd.f32 %v983, %v1033
        %v1045 = vadd.f32 %v984, %v1035
        %v1046 = vadd.f32 %v985, %v1037
        %1047 = vst [vmem:[#allocation2] sm:$0xff] %v1039
        %1048 = vst [vmem:[#allocation2 + $0x8] sm:$0xff] %v1040
        %1049 = vst [vmem:[#allocation2 + $0x10] sm:$0xff] %v1041
        %1050 = vst [vmem:[#allocation2 + $0x18] sm:$0xff] %v1042
        %1051 = vst [vmem:[#allocation2 + $0x20] sm:$0xff] %v1043
        %1052 = vst [vmem:[#allocation2 + $0x28] sm:$0xff] %v1044
        %1053 = vst [vmem:[#allocation2 + $0x30] sm:$0xff] %v1045
        %1054 = vst [vmem:[#allocation2 + $0x38] sm:$0xff] %v1046
        %p1055 = scmp.eq.s32.totalorder %s32, 1
        // Predicated region
        $region65: #{tpu_custom_call.1} parent=47 // pred_check
          %p1056 = pneg %p1055
        $region66: #{tpu_custom_call.1} parent=47 // pred_check_branch
          %1058 = sbr.rel (%p1056) target = $region68
        $region67: #{tpu_custom_call.1} parent=47 // pred_region
          %v1059 = vld [vmem:[%s405] sm:$0xff]
          %v1060 = vld [vmem:[%s6] sm:$0x3]
          %v1061 = vld [vmem:[#allocation2] sm:$0xff]
          %v1062 = vld [vmem:[#allocation2 + $0x8] sm:$0xff]
          %v1063 = vld [vmem:[#allocation2 + $0x10] sm:$0xff]
          %v1064 = vld [vmem:[#allocation2 + $0x18] sm:$0xff]
          %v1065 = vld [vmem:[#allocation2 + $0x20] sm:$0xff]
          %v1066 = vld [vmem:[#allocation2 + $0x28] sm:$0xff]
          %v1067 = vld [vmem:[#allocation2 + $0x30] sm:$0xff]
          %v1068 = vld [vmem:[#allocation2 + $0x38] sm:$0xff]
          %v1069 = vpack.c.bf16 %v1063, %v1061
          %v1070 = vpack.c.bf16 %v1064, %v1062
          %v1071 = vpack.c.bf16 %v1067, %v1065
          %v1072 = vpack.c.bf16 %v1068, %v1066
          %vm1073 = vcmask 261120
          %v1075 = vsel %vm1073, %v1060, 0
          %1077 = vmatprep.subr.bf16.mxu0 0
          %1078 = vmatpush1.bf16.msra.mxu0 0
          %1079 = vmatprep.subr.bf16.mxu0 0
          %1080 = vmatpush1.bf16.msra.mxu0 0
          %1081 = vmatprep.subr.bf16.mxu0 0
          %1082 = vmatpush1.bf16.msra.mxu0 0
          %1083 = vmatprep.subr.bf16.mxu0 0
          %1084 = vmatpush1.bf16.msra.mxu0 0
          %1085 = vmatprep.subr.bf16.mxu0 0
          %1086 = vmatpush1.bf16.msra.mxu0 0
          %1087 = vmatprep.subr.bf16.mxu0 0
          %1088 = vmatpush1.bf16.msra.mxu0 0
          %1089 = vmatprep.subr.bf16.mxu0 %v1072
          %1090 = vmatpush1.bf16.msra.mxu0 %v1071
          %1091 = vmatprep.subr.bf16.mxu0 %v1070
          %1092 = vmatpush1.bf16.msra.mxu0 %v1069
          %1093 = vmatprep.subr.bf16.mxu0 0
          %1094 = vmatpush2.bf16.msra.mxu0 0
          %1095 = vmatprep.subr.bf16.mxu0 0
          %1096 = vmatpush2.bf16.msra.mxu0 0
          %1097 = vmatprep.subr.bf16.mxu0 0
          %1098 = vmatpush2.bf16.msra.mxu0 0
          %1099 = vmatprep.subr.bf16.mxu0 0
          %1100 = vmatpush2.bf16.msra.mxu0 0
          %1101 = vmatprep.subr.bf16.mxu0 0
          %1102 = vmatpush2.bf16.msra.mxu0 0
          %1103 = vmatprep.subr.bf16.mxu0 0
          %1104 = vmatpush2.bf16.msra.mxu0 0
          %1105 = vmatprep.subr.bf16.mxu0 0
          %1106 = vmatpush2.bf16.msra.mxu0 0
          %1107 = vmatprep.subr.bf16.mxu0 0
          %1108 = vmatpush2.bf16.msra.mxu0 0
          %1109 = vmatprep.mubr.bf16.mxu0 0
          %1110 = vmatmul.mubr.bf16.gmra.mxu0 %v1075
          %v1111 = vpop.f32.mrf.mxu0
          %v1112 = vadd.f32 0.0, %v1111
          %v1113 = vpop.f32.mrf.mxu0
          %v1114 = vadd.f32 0.0, %v1113
          %v1115 = vpop.f32.mrf.mxu0
          %v1116 = vpop.f32.mrf.mxu0
          %1117 = vdwg.mxu0
          %v1120 = vcombine.low %v1112, %v1114
          %v1122 = vadd.f32 %v1059, %v1120
          %1123 = vst [vmem:[%s400] sm:$0xff] %v1122
        $region68: #{tpu_custom_call.1} parent=47 // pred_fallthru
          _
        %s1124 = sand.u32 %s218, 1
        %s1125 = scalar_lea.sflag [#allocation5], %s1124
        %s1126 = sand.u32 %s218, 1
        %s1127 = smul.addr %s1126, 8
        %s1128 = scalar_lea.vmem [#allocation9], %s1127
        // Predicated region
        $region69: #{tpu_custom_call.1} parent=47 // pred_check
          %p1129 = pneg %p228
        $region70: #{tpu_custom_call.1} parent=47 // pred_check_branch
          %1131 = sbr.rel (%p1129) target = $region72
        $region71: #{tpu_custom_call.1} parent=47 // pred_region
          %s1133 = ssub.s32 128, 128
          %1134 = vsyncadd %s1125, %s1133
          %s1135 = smul.addr %s31, 2
          %s1136 = smul.addr %s1135, 64
          %s1137 = scalar_lea.hbm %s7, %s1136
          %s1139 = sshll.u32 %s1128, 4
          %s1140 = int_to_ptr.vmem [resolvable:$true] %s1139
          %1142 = dma.vmem_to_hbm [thread:$0]  %s1140, 128, %s1137, %s1125
        $region72: #{tpu_custom_call.1} parent=47 // pred_fallthru
          _
      $region48: #{tpu_custom_call.1} parent=5 // pred_fallthru
        _
      %p1143 = scmp.le.s32.totalorder 2, %s22
      // Predicated region
      $region73: #{tpu_custom_call.1} parent=5 // pred_check
        %p1144 = pneg %p1143
      $region74: #{tpu_custom_call.1} parent=5 // pred_check_branch
        %1146 = sbr.rel (%p1144) target = $region76
      $region75: #{tpu_custom_call.1} parent=5 // pred_region
        %s1147 = ssub.s32 %s22, 2
        // Predicated region
        $region77: #{tpu_custom_call.1} parent=75 // pred_check
          %p1148 = pneg %p234
        $region78: #{tpu_custom_call.1} parent=75 // pred_check_branch
          %1150 = sbr.rel (%p1148) target = $region80
        $region79: #{tpu_custom_call.1} parent=75 // pred_region
          %s1151 = sand.u32 %s219, 1
          %s1152 = scalar_lea.sflag [#allocation5], %s1151
          %s1153 = sand.u32 %s219, 1
          %s1154 = smul.addr %s1153, 8
          %s1155 = scalar_lea.vmem [#allocation9], %s1154
          %1156 = dma.done %s1152, 128
        $region80: #{tpu_custom_call.1} parent=75 // pred_fallthru
          _
      $region76: #{tpu_custom_call.1} parent=5 // pred_fallthru
        _
    $region6: #{tpu_custom_call.1} parent=1 // loop_footer
      %s26 = sadd.s32 1, %s22
    $region7: #{tpu_custom_call.1} parent=1 // loop_footer_branch
      %21 = sbr.rel target = $region3
    $region8: #{tpu_custom_call.1} parent=1 // loop_exit
      _
    %1157 = vsyncpa [#allocation4], 1
    %s1158 = scalar_lea.sflag [#allocation4], 1
    %1159 = vsyncpa %s1158, 1
    %1160 = vsyncpa [#allocation7], 1
    %s1161 = scalar_lea.sflag [#allocation7], 1
    %1162 = vsyncpa %s1161, 1
    %1163 = vsyncpa [#allocation5], 1
    %s1164 = scalar_lea.sflag [#allocation5], 1
    %1165 = vsyncpa %s1164, 1

</llo_original>
